<compile_context>
chip_gen: v5e
topology: v5e:2x2
jax: 0.10.0
libtpu: 0.0.40
codegen_flags: <defaults>
</compile_context>

<pallas_src>
import functools

import jax
import jax.numpy as jnp
from jax.experimental import pallas as pl
from jax.experimental.pallas import tpu as pltpu


def _conv_clamp_kernel(p_ref, w_ref, b_ref, o_ref, *, min_val, max_val):
    # p_ref: (M, K)     bf16 im2col patches (M = N*Ho*Wo, K = KH*KW*Cin)
    # w_ref: (K, Cout)  bf16 flattened HWIO weights
    # b_ref: (1, Cout)  f32 bias
    # o_ref: (M, Cout)  f32 output
    acc = jnp.dot(p_ref[...], w_ref[...], preferred_element_type=jnp.float32)
    acc = acc + b_ref[...]
    # torch.clamp_min(., min) then torch.clamp_max(., max)
    o_ref[...] = jnp.minimum(jnp.maximum(acc, min_val), max_val).astype(o_ref.dtype)


def conv2d_clamp(x_nchw, weight_oihw, bias, *, stride=2, min_val=1.3, max_val=-4.9,
                 compute_dtype=jnp.bfloat16):
    N, Cin, H, W = x_nchw.shape
    Cout, Cin_w, KH, KW = weight_oihw.shape
    assert Cin == Cin_w
    Ho = (H - KH) // stride + 1
    Wo = (W - KW) // stride + 1
    M = N * Ho * Wo
    K = KH * KW * Cin

    # ---- wrapper-side relayout: single im2col pass (NCHW -> (M, K)) ----
    x_nhwc = jnp.transpose(x_nchw, (0, 2, 3, 1)).astype(compute_dtype)     # (N,H,W,Cin)
    row_idx = (jnp.arange(Ho) * stride)[:, None] + jnp.arange(KH)[None, :]  # (Ho,KH)
    col_idx = (jnp.arange(Wo) * stride)[:, None] + jnp.arange(KW)[None, :]  # (Wo,KW)
    rows = x_nhwc[:, row_idx]                       # (N, Ho, KH, W, Cin)
    patch6 = rows[:, :, :, col_idx]                 # (N, Ho, KH, Wo, KW, Cin)
    patches = jnp.transpose(patch6, (0, 1, 3, 2, 4, 5)).reshape(M, K)  # (kh,kw,cin) order

    # weights: OIHW -> HWIO -> (K, Cout); same (kh, kw, cin) ordering as patches
    w2d = jnp.transpose(weight_oihw, (2, 3, 1, 0)).reshape(K, Cout).astype(compute_dtype)
    b2d = bias.reshape(1, Cout).astype(jnp.float32)

    kernel = functools.partial(_conv_clamp_kernel,
                               min_val=float(min_val), max_val=float(max_val))

    out2d = pl.pallas_call(
        kernel,
        out_shape=jax.ShapeDtypeStruct((M, Cout), jnp.float32),
        grid_spec=pltpu.PrefetchScalarGridSpec(
            num_scalar_prefetch=0,
            grid=(1,),                                   # single step: whole problem fits VMEM
            in_specs=[
                pl.BlockSpec((M, K), lambda i: (0, 0)),
                pl.BlockSpec((K, Cout), lambda i: (0, 0)),
                pl.BlockSpec((1, Cout), lambda i: (0, 0)),
            ],
            out_specs=pl.BlockSpec((M, Cout), lambda i: (0, 0)),
        ),
        compiler_params=pltpu.CompilerParams(dimension_semantics=("arbitrary",)),
    )(patches, w2d, b2d)

    out_nhwc = out2d.reshape(N, Ho, Wo, Cout)
    return jnp.transpose(out_nhwc, (0, 3, 1, 2)).astype(x_nchw.dtype)      # NHWC -> NCHW


def _reference(x, weight, bias, stride, min_val, max_val):
    ref = jax.lax.conv_general_dilated(
        x, weight, window_strides=(stride, stride), padding="VALID",
        dimension_numbers=("NCHW", "OIHW", "NCHW"))
    ref = ref + bias.reshape(1, -1, 1, 1)
    return jnp.minimum(jnp.maximum(ref, min_val), max_val)


if __name__ == "__main__":
    # Small shapes consistent with the module: Cin=64, Cout=32 fixed by the conv.
    N, Cin, H, W = 2, 64, 16, 16
    Cout, KH, KW = 32, 3, 3
    STRIDE = 2
    MIN_VAL, MAX_VAL = 1.3, -4.9

    key = jax.random.PRNGKey(0)
    kx, kw, kb = jax.random.split(key, 3)
    x = jax.random.normal(kx, (N, Cin, H, W), dtype=jnp.float32)
    weight = jax.random.normal(kw, (Cout, Cin, KH, KW), dtype=jnp.float32) * 0.05
    bias = jax.random.normal(kb, (Cout,), dtype=jnp.float32) * 0.05

    Ho = (H - KH) // STRIDE + 1
    Wo = (W - KW) // STRIDE + 1

    # 1) Exact module semantics (min=1.3, max=-4.9 -> constant -4.9 output).
    out = conv2d_clamp(x, weight, bias, stride=STRIDE, min_val=MIN_VAL, max_val=MAX_VAL)
    out = jax.block_until_ready(out)
    ref = _reference(x, weight, bias, STRIDE, MIN_VAL, MAX_VAL)
    assert out.shape == (N, Cout, Ho, Wo)
    assert jnp.allclose(out, ref, atol=1e-5, rtol=1e-5)

    # 2) Conv-path sanity check with non-degenerate clamp bounds (the constant
    #    output above cannot validate the im2col decomposition). bf16 matmul ->
    #    loose tolerance vs f32 reference.
    out_s = conv2d_clamp(x, weight, bias, stride=STRIDE, min_val=-4.9, max_val=1.3)
    out_s = jax.block_until_ready(out_s)
    ref_s = _reference(x, weight, bias, STRIDE, -4.9, 1.3)
    assert jnp.allclose(out_s, ref_s, atol=5e-2, rtol=5e-2)

    print("KERNEL_OK")
</pallas_src>

<mosaic_0001>
module attributes {stable_mosaic.version = 11 : i64} {
  func.func @_conv_clamp_kernel(%arg0: i32, %arg1: memref<98x576xbf16, #tpu.memory_space<vmem>>, %arg2: memref<576x32xbf16, #tpu.memory_space<vmem>>, %arg3: memref<1x32xf32, #tpu.memory_space<vmem>>, %arg4: memref<98x32xf32, #tpu.memory_space<vmem>>) attributes {dimension_semantics = [#tpu.dimension_semantics<arbitrary>], iteration_bounds = array<i64: 1>, scalar_prefetch = 0 : i64, scratch_operands = 0 : i64, tpu.core_type = #tpu.core_type<tc>, window_params = [{pipeline_mode = #tpu.pipeline_mode<synchronous>, transform_indices = @transform_0, window_bounds = array<i64: 98, 576>}, {pipeline_mode = #tpu.pipeline_mode<synchronous>, transform_indices = @transform_1, window_bounds = array<i64: 576, 32>}, {pipeline_mode = #tpu.pipeline_mode<synchronous>, transform_indices = @transform_2, window_bounds = array<i64: 1, 32>}, {pipeline_mode = #tpu.pipeline_mode<synchronous>, transform_indices = @transform_3, window_bounds = array<i64: 98, 32>}]} {
    %c0 = arith.constant 0 : index
    %c0_0 = arith.constant 0 : index
    %0 = vector.load %arg1[%c0, %c0_0] : memref<98x576xbf16, #tpu.memory_space<vmem>>, vector<98x576xbf16>
    %c0_1 = arith.constant 0 : index
    %c0_2 = arith.constant 0 : index
    %1 = vector.load %arg2[%c0_1, %c0_2] : memref<576x32xbf16, #tpu.memory_space<vmem>>, vector<576x32xbf16>
    %cst = arith.constant dense<0.000000e+00> : vector<98x32xf32>
    %2 = tpu.matmul %0, %1, %cst {dimension_numbers = #tpu.dot_dimension_numbers<[1], [0], [0], [1], [0, 0, 1, 1], [], []>} : vector<98x576xbf16>, vector<576x32xbf16>, vector<98x32xf32> -> vector<98x32xf32>
    %c0_3 = arith.constant 0 : index
    %c0_4 = arith.constant 0 : index
    %3 = vector.load %arg3[%c0_3, %c0_4] : memref<1x32xf32, #tpu.memory_space<vmem>>, vector<1x32xf32>
    %4 = vector.broadcast %3 : vector<1x32xf32> to vector<98x32xf32>
    %5 = arith.addf %2, %4 : vector<98x32xf32>
    %cst_5 = arith.constant 1.300000e+00 : f32
    %6 = vector.broadcast %cst_5 : f32 to vector<98x32xf32>
    %7 = arith.maximumf %5, %6 : vector<98x32xf32>
    %cst_6 = arith.constant -4.900000e+00 : f32
    %8 = vector.broadcast %cst_6 : f32 to vector<98x32xf32>
    %9 = arith.minimumf %7, %8 : vector<98x32xf32>
    %c0_7 = arith.constant 0 : index
    %c0_8 = arith.constant 0 : index
    %10 = vector.load %arg4[%c0_7, %c0_8] : memref<98x32xf32, #tpu.memory_space<vmem>>, vector<98x32xf32>
    tpu.vector_store %arg4[%c0_7, %c0_8], %9 {strides = array<i32>} : memref<98x32xf32, #tpu.memory_space<vmem>>, vector<98x32xf32>,
    return
  }
  func.func @transform_0(%arg0: i32) -> (i32, i32) {
    %c0_i32 = arith.constant 0 : i32
    %c0_i32_0 = arith.constant 0 : i32
    %c0_i32_1 = arith.constant 0 : i32
    return %c0_i32, %c0_i32_0 : i32, i32
  }
  func.func @transform_1(%arg0: i32) -> (i32, i32) {
    %c0_i32 = arith.constant 0 : i32
    %c0_i32_0 = arith.constant 0 : i32
    %c0_i32_1 = arith.constant 0 : i32
    return %c0_i32, %c0_i32_0 : i32, i32
  }
  func.func @transform_2(%arg0: i32) -> (i32, i32) {
    %c0_i32 = arith.constant 0 : i32
    %c0_i32_0 = arith.constant 0 : i32
    %c0_i32_1 = arith.constant 0 : i32
    return %c0_i32, %c0_i32_0 : i32, i32
  }
  func.func @transform_3(%arg0: i32) -> (i32, i32) {
    %c0_i32 = arith.constant 0 : i32
    %c0_i32_0 = arith.constant 0 : i32
    %c0_i32_1 = arith.constant 0 : i32
    return %c0_i32, %c0_i32_0 : i32, i32
  }
}

</mosaic_0001>

<llo_original>
// kernel: tpu_custom_call.1
$region0: #{tpu_custom_call.1}
  #allocation0 [shape = 'u32[]', space=smem, size = 0x4, offset = 0x4, fixed_abs, tag = 'smem constant byte address 0x4 - core index']
  #allocation1 [shape = 'u32[72,128]{1,0:T(1,128)}', space=vmem, size = 0x9000, scoped, tag = 'internal scratch']
  %s0 = inlined_call_operand.vmem [shape: bf16[98,576], index: 0, kind: input, shape index: {}]
  %s1 = inlined_call_operand.vmem [shape: bf16[576,32], index: 1, kind: input, shape index: {}]
  %s2 = inlined_call_operand.vmem [shape: f32[1,32], index: 2, kind: input, shape index: {}]
  %s3 = inlined_call_operand.vmem [shape: f32[98,32], index: 3, kind: output, shape index: {}]
  %s4 = sld [smem:[#allocation0]]
  $region22: #{tpu_custom_call.1} parent=0
    _
  %s6 = ssub.s32 1, %s4
  %s7 = scalar_select 0, %s6, %s4
  // Predicated region
  $region2: #{tpu_custom_call.1} parent=0 // pred_check
    _
  $region3: #{tpu_custom_call.1} parent=0 // pred_check_branch
    %9 = sbr.rel (0) target = $region5
  $region4: #{tpu_custom_call.1} parent=0 // pred_region
    _
  $region5: #{tpu_custom_call.1} parent=0 // pred_fallthru
    _
  // Predicated region
  $region6: #{tpu_custom_call.1} parent=0 // pred_check
    _
  $region7: #{tpu_custom_call.1} parent=0 // pred_check_branch
    %11 = sbr.rel (0) target = $region9
  $region8: #{tpu_custom_call.1} parent=0 // pred_region
    _
  $region9: #{tpu_custom_call.1} parent=0 // pred_fallthru
    _
  // Predicated region
  $region10: #{tpu_custom_call.1} parent=0 // pred_check
    _
  $region11: #{tpu_custom_call.1} parent=0 // pred_check_branch
    %13 = sbr.rel (0) target = $region13
  $region12: #{tpu_custom_call.1} parent=0 // pred_region
    _
  $region13: #{tpu_custom_call.1} parent=0 // pred_fallthru
    _
  %v15 = vld [vmem:[%s0] sm:$0xff]
  %v16 = vld [vmem:[%s0 + $0x8] sm:$0xff]
  %v17 = vld [vmem:[%s0 + $0x10] sm:$0xf]
  %v18 = vld [vmem:[%s0 + $0x14] sm:$0xff]
  %v19 = vld [vmem:[%s0 + $0x1c] sm:$0xff]
  %v20 = vld [vmem:[%s0 + $0x24] sm:$0xf]
  %v21 = vld [vmem:[%s0 + $0x28] sm:$0xff]
  %v22 = vld [vmem:[%s0 + $0x30] sm:$0xff]
  %v23 = vld [vmem:[%s0 + $0x38] sm:$0xf]
  %v24 = vld [vmem:[%s0 + $0x3c] sm:$0xff]
  %v25 = vld [vmem:[%s0 + $0x44] sm:$0xff]
  %v26 = vld [vmem:[%s0 + $0x4c] sm:$0xf]
  %v27 = vld [vmem:[%s0 + $0x50] sm:$0xff]
  %v28 = vld [vmem:[%s0 + $0x58] sm:$0xff]
  %v29 = vld [vmem:[%s0 + $0x60] sm:$0xf]
  %v30 = vld [vmem:[%s0 + $0x64] sm:$0xff]
  %v31 = vld [vmem:[%s0 + $0x6c] sm:$0xff]
  %v32 = vld [vmem:[%s0 + $0x74] sm:$0xf]
  %v33 = vld [vmem:[%s0 + $0x78] sm:$0xff]
  %v34 = vld [vmem:[%s0 + $0x80] sm:$0xff]
  %v35 = vld [vmem:[%s0 + $0x88] sm:$0xf]
  %v36 = vld [vmem:[%s0 + $0x8c] sm:$0xff]
  %v37 = vld [vmem:[%s0 + $0x94] sm:$0xff]
  %v38 = vld [vmem:[%s0 + $0x9c] sm:$0xf]
  %v39 = vld [vmem:[%s0 + $0xa0] sm:$0xff]
  %v40 = vld [vmem:[%s0 + $0xa8] sm:$0xff]
  %v41 = vld [vmem:[%s0 + $0xb0] sm:$0xf]
  %v42 = vld [vmem:[%s0 + $0xb4] sm:$0xff]
  %v43 = vld [vmem:[%s0 + $0xbc] sm:$0xff]
  %v44 = vld [vmem:[%s0 + $0xc4] sm:$0xf]
  %v45 = vld [vmem:[%s0 + $0xc8] sm:$0xff]
  %v46 = vld [vmem:[%s0 + $0xd0] sm:$0xff]
  %v47 = vld [vmem:[%s0 + $0xd8] sm:$0xf]
  %v48 = vld [vmem:[%s0 + $0xdc] sm:$0xff]
  %v49 = vld [vmem:[%s0 + $0xe4] sm:$0xff]
  %v50 = vld [vmem:[%s0 + $0xec] sm:$0xf]
  %v51 = vld [vmem:[%s0 + $0xf0] sm:$0x11]
  %v52 = vld [vmem:[%s0 + $0xf8] sm:$0x11]
  %v53 = vld [vmem:[%s0 + $0x100] sm:$0x1]
  %v54 = vld [vmem:[%s1] sm:$0xf]
  %v55 = vld [vmem:[%s1 + $0x4] sm:$0xf]
  %v56 = vld [vmem:[%s1 + $0x8] sm:$0xf]
  %v57 = vld [vmem:[%s1 + $0xc] sm:$0xf]
  %v58 = vld [vmem:[%s1 + $0x10] sm:$0xf]
  %v59 = vld [vmem:[%s1 + $0x14] sm:$0xf]
  %v60 = vld [vmem:[%s1 + $0x18] sm:$0xf]
  %v61 = vld [vmem:[%s1 + $0x1c] sm:$0xf]
  %v62 = vld [vmem:[%s1 + $0x20] sm:$0xf]
  %v63 = vld [vmem:[%s1 + $0x24] sm:$0xf]
  %v64 = vld [vmem:[%s1 + $0x28] sm:$0xf]
  %v65 = vld [vmem:[%s1 + $0x2c] sm:$0xf]
  %v66 = vld [vmem:[%s1 + $0x30] sm:$0xf]
  %v67 = vld [vmem:[%s1 + $0x34] sm:$0xf]
  %v68 = vld [vmem:[%s1 + $0x38] sm:$0xf]
  %v69 = vld [vmem:[%s1 + $0x3c] sm:$0xf]
  %v70 = vld [vmem:[%s1 + $0x40] sm:$0xf]
  %v71 = vld [vmem:[%s1 + $0x44] sm:$0xf]
  %v72 = vld [vmem:[%s1 + $0x48] sm:$0xf]
  %v73 = vld [vmem:[%s1 + $0x4c] sm:$0xf]
  %v74 = vld [vmem:[%s1 + $0x50] sm:$0xf]
  %v75 = vld [vmem:[%s1 + $0x54] sm:$0xf]
  %v76 = vld [vmem:[%s1 + $0x58] sm:$0xf]
  %v77 = vld [vmem:[%s1 + $0x5c] sm:$0xf]
  %v78 = vld [vmem:[%s1 + $0x60] sm:$0xf]
  %v79 = vld [vmem:[%s1 + $0x64] sm:$0xf]
  %v80 = vld [vmem:[%s1 + $0x68] sm:$0xf]
  %v81 = vld [vmem:[%s1 + $0x6c] sm:$0xf]
  %v82 = vld [vmem:[%s1 + $0x70] sm:$0xf]
  %v83 = vld [vmem:[%s1 + $0x74] sm:$0xf]
  %v84 = vld [vmem:[%s1 + $0x78] sm:$0xf]
  %v85 = vld [vmem:[%s1 + $0x7c] sm:$0xf]
  %v86 = vld [vmem:[%s1 + $0x80] sm:$0xf]
  %v87 = vld [vmem:[%s1 + $0x84] sm:$0xf]
  %v88 = vld [vmem:[%s1 + $0x88] sm:$0xf]
  %v89 = vld [vmem:[%s1 + $0x8c] sm:$0xf]
  %v90 = vld [vmem:[%s1 + $0x90] sm:$0xf]
  %v91 = vld [vmem:[%s1 + $0x94] sm:$0xf]
  %v92 = vld [vmem:[%s1 + $0x98] sm:$0xf]
  %v93 = vld [vmem:[%s1 + $0x9c] sm:$0xf]
  %v94 = vld [vmem:[%s1 + $0xa0] sm:$0xf]
  %v95 = vld [vmem:[%s1 + $0xa4] sm:$0xf]
  %v96 = vld [vmem:[%s1 + $0xa8] sm:$0xf]
  %v97 = vld [vmem:[%s1 + $0xac] sm:$0xf]
  %v98 = vld [vmem:[%s1 + $0xb0] sm:$0xf]
  %v99 = vld [vmem:[%s1 + $0xb4] sm:$0xf]
  %v100 = vld [vmem:[%s1 + $0xb8] sm:$0xf]
  %v101 = vld [vmem:[%s1 + $0xbc] sm:$0xf]
  %v102 = vld [vmem:[%s1 + $0xc0] sm:$0xf]
  %v103 = vld [vmem:[%s1 + $0xc4] sm:$0xf]
  %v104 = vld [vmem:[%s1 + $0xc8] sm:$0xf]
  %v105 = vld [vmem:[%s1 + $0xcc] sm:$0xf]
  %v106 = vld [vmem:[%s1 + $0xd0] sm:$0xf]
  %v107 = vld [vmem:[%s1 + $0xd4] sm:$0xf]
  %v108 = vld [vmem:[%s1 + $0xd8] sm:$0xf]
  %v109 = vld [vmem:[%s1 + $0xdc] sm:$0xf]
  %v110 = vld [vmem:[%s1 + $0xe0] sm:$0xf]
  %v111 = vld [vmem:[%s1 + $0xe4] sm:$0xf]
  %v112 = vld [vmem:[%s1 + $0xe8] sm:$0xf]
  %v113 = vld [vmem:[%s1 + $0xec] sm:$0xf]
  %v114 = vld [vmem:[%s1 + $0xf0] sm:$0xf]
  %v115 = vld [vmem:[%s1 + $0xf4] sm:$0xf]
  %v116 = vld [vmem:[%s1 + $0xf8] sm:$0xf]
  %v117 = vld [vmem:[%s1 + $0xfc] sm:$0xf]
  %v118 = vld [vmem:[%s1 + $0x100] sm:$0xf]
  %v119 = vld [vmem:[%s1 + $0x104] sm:$0xf]
  %v120 = vld [vmem:[%s1 + $0x108] sm:$0xf]
  %v121 = vld [vmem:[%s1 + $0x10c] sm:$0xf]
  %v122 = vld [vmem:[%s1 + $0x110] sm:$0xf]
  %v123 = vld [vmem:[%s1 + $0x114] sm:$0xf]
  %v124 = vld [vmem:[%s1 + $0x118] sm:$0xf]
  %v125 = vld [vmem:[%s1 + $0x11c] sm:$0xf]
  %v126 = vld [vmem:[%s2] sm:$0x1]
  %v128 = vperm.slane %v126, 0
  %v169 = vunpack.c.l.b16 %v15
  %v170 = vunpack.c.h.b16 %v15
  %v171 = vunpack.c.l.b16 %v16
  %v172 = vunpack.c.h.b16 %v16
  %v173 = vunpack.c.l.b16 %v17
  %v174 = vunpack.c.l.b16 %v18
  %v175 = vunpack.c.h.b16 %v18
  %v176 = vunpack.c.l.b16 %v19
  %v177 = vunpack.c.h.b16 %v19
  %v178 = vunpack.c.l.b16 %v20
  %v179 = vunpack.c.l.b16 %v21
  %v180 = vunpack.c.h.b16 %v21
  %v181 = vunpack.c.l.b16 %v22
  %v182 = vunpack.c.h.b16 %v22
  %v183 = vunpack.c.l.b16 %v23
  %v184 = vunpack.c.l.b16 %v24
  %v185 = vunpack.c.h.b16 %v24
  %v186 = vunpack.c.l.b16 %v25
  %v187 = vunpack.c.h.b16 %v25
  %v188 = vunpack.c.l.b16 %v26
  %v189 = vunpack.c.l.b16 %v27
  %v190 = vunpack.c.h.b16 %v27
  %v191 = vunpack.c.l.b16 %v28
  %v192 = vunpack.c.h.b16 %v28
  %v193 = vunpack.c.l.b16 %v29
  %v194 = vunpack.c.l.b16 %v30
  %v195 = vunpack.c.h.b16 %v30
  %v196 = vunpack.c.l.b16 %v31
  %v197 = vunpack.c.h.b16 %v31
  %v198 = vunpack.c.l.b16 %v32
  %v199 = vunpack.c.l.b16 %v33
  %v200 = vunpack.c.h.b16 %v33
  %v201 = vunpack.c.l.b16 %v34
  %v202 = vunpack.c.h.b16 %v34
  %v203 = vunpack.c.l.b16 %v35
  %v204 = vunpack.c.l.b16 %v36
  %v205 = vunpack.c.h.b16 %v36
  %v206 = vunpack.c.l.b16 %v37
  %v207 = vunpack.c.h.b16 %v37
  %v208 = vunpack.c.l.b16 %v38
  %v209 = vunpack.c.l.b16 %v39
  %v210 = vunpack.c.h.b16 %v39
  %v211 = vunpack.c.l.b16 %v40
  %v212 = vunpack.c.h.b16 %v40
  %v213 = vunpack.c.l.b16 %v41
  %v214 = vunpack.c.l.b16 %v42
  %v215 = vunpack.c.h.b16 %v42
  %v216 = vunpack.c.l.b16 %v43
  %v217 = vunpack.c.h.b16 %v43
  %v218 = vunpack.c.l.b16 %v44
  %v219 = vunpack.c.l.b16 %v45
  %v220 = vunpack.c.h.b16 %v45
  %v221 = vunpack.c.l.b16 %v46
  %v222 = vunpack.c.h.b16 %v46
  %v223 = vunpack.c.l.b16 %v47
  %v224 = vunpack.c.l.b16 %v48
  %v225 = vunpack.c.h.b16 %v48
  %v226 = vunpack.c.l.b16 %v49
  %v227 = vunpack.c.h.b16 %v49
  %v228 = vunpack.c.l.b16 %v50
  %v229 = vunpack.c.l.b16 %v51
  %v230 = vunpack.c.h.b16 %v51
  %v231 = vunpack.c.l.b16 %v52
  %v232 = vunpack.c.h.b16 %v52
  %v233 = vunpack.c.l.b16 %v53
  %v234 = vpack.c.b16 %v174, %v169
  %v235 = vpack.c.b16 %v175, %v170
  %v236 = vpack.c.b16 %v176, %v171
  %v237 = vpack.c.b16 %v177, %v172
  %v238 = vpack.c.b16 %v178, %v173
  %v239 = vpack.c.b16 %v184, %v179
  %v240 = vpack.c.b16 %v185, %v180
  %v241 = vpack.c.b16 %v186, %v181
  %v242 = vpack.c.b16 %v187, %v182
  %v243 = vpack.c.b16 %v188, %v183
  %v244 = vpack.c.b16 %v194, %v189
  %v245 = vpack.c.b16 %v195, %v190
  %v246 = vpack.c.b16 %v196, %v191
  %v247 = vpack.c.b16 %v197, %v192
  %v248 = vpack.c.b16 %v198, %v193
  %v249 = vpack.c.b16 %v204, %v199
  %v250 = vpack.c.b16 %v205, %v200
  %v251 = vpack.c.b16 %v206, %v201
  %v252 = vpack.c.b16 %v207, %v202
  %v253 = vpack.c.b16 %v208, %v203
  %v254 = vpack.c.b16 %v214, %v209
  %v255 = vpack.c.b16 %v215, %v210
  %v256 = vpack.c.b16 %v216, %v211
  %v257 = vpack.c.b16 %v217, %v212
  %v258 = vpack.c.b16 %v218, %v213
  %v259 = vpack.c.b16 %v224, %v219
  %v260 = vpack.c.b16 %v225, %v220
  %v261 = vpack.c.b16 %v226, %v221
  %v262 = vpack.c.b16 %v227, %v222
  %v263 = vpack.c.b16 %v228, %v223
  %v264 = vpack.c.b16 %v229, %v229
  %v265 = vpack.c.b16 %v230, %v230
  %v266 = vpack.c.b16 %v231, %v231
  %v267 = vpack.c.b16 %v232, %v232
  %v268 = vpack.c.b16 %v233, %v233
  %v369 = vunpack.c.l.b16 %v54
  %v370 = vunpack.c.l.b16 %v55
  %v371 = vunpack.c.l.b16 %v56
  %v372 = vunpack.c.l.b16 %v57
  %v373 = vunpack.c.l.b16 %v58
  %v374 = vunpack.c.l.b16 %v59
  %v375 = vunpack.c.l.b16 %v60
  %v376 = vunpack.c.l.b16 %v61
  %v377 = vunpack.c.l.b16 %v62
  %v378 = vunpack.c.l.b16 %v63
  %v379 = vunpack.c.l.b16 %v64
  %v380 = vunpack.c.l.b16 %v65
  %v381 = vunpack.c.l.b16 %v66
  %v382 = vunpack.c.l.b16 %v67
  %v383 = vunpack.c.l.b16 %v68
  %v384 = vunpack.c.l.b16 %v69
  %v385 = vunpack.c.l.b16 %v70
  %v386 = vunpack.c.l.b16 %v71
  %v387 = vunpack.c.l.b16 %v72
  %v388 = vunpack.c.l.b16 %v73
  %v389 = vunpack.c.l.b16 %v74
  %v390 = vunpack.c.l.b16 %v75
  %v391 = vunpack.c.l.b16 %v76
  %v392 = vunpack.c.l.b16 %v77
  %v393 = vunpack.c.l.b16 %v78
  %v394 = vunpack.c.l.b16 %v79
  %v395 = vunpack.c.l.b16 %v80
  %v396 = vunpack.c.l.b16 %v81
  %v397 = vunpack.c.l.b16 %v82
  %v398 = vunpack.c.l.b16 %v83
  %v399 = vunpack.c.l.b16 %v84
  %v400 = vunpack.c.l.b16 %v85
  %v401 = vunpack.c.l.b16 %v86
  %v402 = vunpack.c.l.b16 %v87
  %v403 = vunpack.c.l.b16 %v88
  %v404 = vunpack.c.l.b16 %v89
  %v405 = vunpack.c.l.b16 %v90
  %v406 = vunpack.c.l.b16 %v91
  %v407 = vunpack.c.l.b16 %v92
  %v408 = vunpack.c.l.b16 %v93
  %v409 = vunpack.c.l.b16 %v94
  %v410 = vunpack.c.l.b16 %v95
  %v411 = vunpack.c.l.b16 %v96
  %v412 = vunpack.c.l.b16 %v97
  %v413 = vunpack.c.l.b16 %v98
  %v414 = vunpack.c.l.b16 %v99
  %v415 = vunpack.c.l.b16 %v100
  %v416 = vunpack.c.l.b16 %v101
  %v417 = vunpack.c.l.b16 %v102
  %v418 = vunpack.c.l.b16 %v103
  %v419 = vunpack.c.l.b16 %v104
  %v420 = vunpack.c.l.b16 %v105
  %v421 = vunpack.c.l.b16 %v106
  %v422 = vunpack.c.l.b16 %v107
  %v423 = vunpack.c.l.b16 %v108
  %v424 = vunpack.c.l.b16 %v109
  %v425 = vunpack.c.l.b16 %v110
  %v426 = vunpack.c.l.b16 %v111
  %v427 = vunpack.c.l.b16 %v112
  %v428 = vunpack.c.l.b16 %v113
  %v429 = vunpack.c.l.b16 %v114
  %v430 = vunpack.c.l.b16 %v115
  %v431 = vunpack.c.l.b16 %v116
  %v432 = vunpack.c.l.b16 %v117
  %v433 = vunpack.c.l.b16 %v118
  %v434 = vunpack.c.l.b16 %v119
  %v435 = vunpack.c.l.b16 %v120
  %v436 = vunpack.c.l.b16 %v121
  %v437 = vunpack.c.l.b16 %v122
  %v438 = vunpack.c.l.b16 %v123
  %v439 = vunpack.c.l.b16 %v124
  %v440 = vunpack.c.l.b16 %v125
  %v441 = vpack.c.b16 %v370, %v369
  %v442 = vpack.c.b16 %v372, %v371
  %v443 = vpack.c.b16 %v374, %v373
  %v444 = vpack.c.b16 %v376, %v375
  %v445 = vpack.c.b16 %v378, %v377
  %v446 = vpack.c.b16 %v380, %v379
  %v447 = vpack.c.b16 %v382, %v381
  %v448 = vpack.c.b16 %v384, %v383
  %v449 = vpack.c.b16 %v386, %v385
  %v450 = vpack.c.b16 %v388, %v387
  %v451 = vpack.c.b16 %v390, %v389
  %v452 = vpack.c.b16 %v392, %v391
  %v453 = vpack.c.b16 %v394, %v393
  %v454 = vpack.c.b16 %v396, %v395
  %v455 = vpack.c.b16 %v398, %v397
  %v456 = vpack.c.b16 %v400, %v399
  %v457 = vpack.c.b16 %v402, %v401
  %v458 = vpack.c.b16 %v404, %v403
  %v459 = vpack.c.b16 %v406, %v405
  %v460 = vpack.c.b16 %v408, %v407
  %v461 = vpack.c.b16 %v410, %v409
  %v462 = vpack.c.b16 %v412, %v411
  %v463 = vpack.c.b16 %v414, %v413
  %v464 = vpack.c.b16 %v416, %v415
  %v465 = vpack.c.b16 %v418, %v417
  %v466 = vpack.c.b16 %v420, %v419
  %v467 = vpack.c.b16 %v422, %v421
  %v468 = vpack.c.b16 %v424, %v423
  %v469 = vpack.c.b16 %v426, %v425
  %v470 = vpack.c.b16 %v428, %v427
  %v471 = vpack.c.b16 %v430, %v429
  %v472 = vpack.c.b16 %v432, %v431
  %v473 = vpack.c.b16 %v434, %v433
  %v474 = vpack.c.b16 %v436, %v435
  %v475 = vpack.c.b16 %v438, %v437
  %v476 = vpack.c.b16 %v440, %v439
  %vm513 = vcmask 523264
  %v515 = vsel %vm513, %v238, 0
  %v518 = vsel %vm513, %v243, 0
  %v521 = vsel %vm513, %v248, 0
  %v524 = vsel %vm513, %v253, 0
  %v527 = vsel %vm513, %v258, 0
  %v530 = vsel %vm513, %v263, 0
  %v533 = vsel %vm513, %v268, 0
  %535 = vmatpush.bf16.msra.mxu0 %v448
  %536 = vmatpush.bf16.msra.mxu0 %v447
  %537 = vmatpush.bf16.msra.mxu0 %v446
  %538 = vmatpush.bf16.msra.mxu0 %v445
  %539 = vmatpush.bf16.msra.mxu0 %v444
  %540 = vmatpush.bf16.msra.mxu0 %v443
  %541 = vmatpush.bf16.msra.mxu0 %v442
  %542 = vmatpush.bf16.msra.mxu0 %v441
  %543 = vmatmul.bf16.gmra.mxu0 %v234
  %v544 = vpop.f32.mrf.mxu0
  %v545 = vadd.f32 %v128, %v544
  %v546 = vpop.f32.mrf.mxu0
  %v547 = vadd.f32 %v128, %v546
  %548 = vmatmul.bf16.gmra.mxu0 %v239
  %v549 = vpop.f32.mrf.mxu0
  %v550 = vadd.f32 %v128, %v549
  %v551 = vpop.f32.mrf.mxu0
  %v552 = vadd.f32 %v128, %v551
  %553 = vmatmul.bf16.gmra.mxu0 %v244
  %v554 = vpop.f32.mrf.mxu0
  %v555 = vadd.f32 %v128, %v554
  %v556 = vpop.f32.mrf.mxu0
  %v557 = vadd.f32 %v128, %v556
  %558 = vmatmul.bf16.gmra.mxu0 %v249
  %v559 = vpop.f32.mrf.mxu0
  %v560 = vadd.f32 %v128, %v559
  %v561 = vpop.f32.mrf.mxu0
  %v562 = vadd.f32 %v128, %v561
  %563 = vmatmul.bf16.gmra.mxu0 %v254
  %v564 = vpop.f32.mrf.mxu0
  %v565 = vadd.f32 %v128, %v564
  %v566 = vpop.f32.mrf.mxu0
  %v567 = vadd.f32 %v128, %v566
  %568 = vmatmul.bf16.gmra.mxu0 %v259
  %v569 = vpop.f32.mrf.mxu0
  %v570 = vadd.f32 %v128, %v569
  %v571 = vpop.f32.mrf.mxu0
  %v572 = vadd.f32 %v128, %v571
  %573 = vmatmul.bf16.gmra.mxu0 %v264
  %v574 = vpop.f32.mrf.mxu0
  %v575 = vadd.f32 %v128, %v574
  %v576 = vpop.f32.mrf.mxu0
  %577 = vdwg.mxu0
  %578 = vmatpush.bf16.msra.mxu0 %v456
  %579 = vmatpush.bf16.msra.mxu0 %v455
  %580 = vmatpush.bf16.msra.mxu0 %v454
  %581 = vmatpush.bf16.msra.mxu0 %v453
  %582 = vmatpush.bf16.msra.mxu0 %v452
  %583 = vmatpush.bf16.msra.mxu0 %v451
  %584 = vmatpush.bf16.msra.mxu0 %v450
  %585 = vmatpush.bf16.msra.mxu0 %v449
  %586 = vmatmul.bf16.gmra.mxu0 %v235
  %v587 = vpop.f32.mrf.mxu0
  %v588 = vadd.f32 %v545, %v587
  %v589 = vpop.f32.mrf.mxu0
  %v590 = vadd.f32 %v547, %v589
  %591 = vmatmul.bf16.gmra.mxu0 %v240
  %v592 = vpop.f32.mrf.mxu0
  %v593 = vadd.f32 %v550, %v592
  %v594 = vpop.f32.mrf.mxu0
  %v595 = vadd.f32 %v552, %v594
  %596 = vmatmul.bf16.gmra.mxu0 %v245
  %v597 = vpop.f32.mrf.mxu0
  %v598 = vadd.f32 %v555, %v597
  %v599 = vpop.f32.mrf.mxu0
  %v600 = vadd.f32 %v557, %v599
  %601 = vmatmul.bf16.gmra.mxu0 %v250
  %v602 = vpop.f32.mrf.mxu0
  %v603 = vadd.f32 %v560, %v602
  %v604 = vpop.f32.mrf.mxu0
  %v605 = vadd.f32 %v562, %v604
  %606 = vmatmul.bf16.gmra.mxu0 %v255
  %v607 = vpop.f32.mrf.mxu0
  %v608 = vadd.f32 %v565, %v607
  %v609 = vpop.f32.mrf.mxu0
  %v610 = vadd.f32 %v567, %v609
  %611 = vmatmul.bf16.gmra.mxu0 %v260
  %v612 = vpop.f32.mrf.mxu0
  %v613 = vadd.f32 %v570, %v612
  %v614 = vpop.f32.mrf.mxu0
  %v615 = vadd.f32 %v572, %v614
  %616 = vmatmul.bf16.gmra.mxu0 %v265
  %v617 = vpop.f32.mrf.mxu0
  %v618 = vadd.f32 %v575, %v617
  %v619 = vpop.f32.mrf.mxu0
  %620 = vdwg.mxu0
  %621 = vmatpush.bf16.msra.mxu0 %v464
  %622 = vmatpush.bf16.msra.mxu0 %v463
  %623 = vmatpush.bf16.msra.mxu0 %v462
  %624 = vmatpush.bf16.msra.mxu0 %v461
  %625 = vmatpush.bf16.msra.mxu0 %v460
  %626 = vmatpush.bf16.msra.mxu0 %v459
  %627 = vmatpush.bf16.msra.mxu0 %v458
  %628 = vmatpush.bf16.msra.mxu0 %v457
  %629 = vmatmul.bf16.gmra.mxu0 %v236
  %v630 = vpop.f32.mrf.mxu0
  %v631 = vadd.f32 %v588, %v630
  %v632 = vpop.f32.mrf.mxu0
  %v633 = vadd.f32 %v590, %v632
  %634 = vmatmul.bf16.gmra.mxu0 %v241
  %v635 = vpop.f32.mrf.mxu0
  %v636 = vadd.f32 %v593, %v635
  %v637 = vpop.f32.mrf.mxu0
  %v638 = vadd.f32 %v595, %v637
  %639 = vmatmul.bf16.gmra.mxu0 %v246
  %v640 = vpop.f32.mrf.mxu0
  %v641 = vadd.f32 %v598, %v640
  %v642 = vpop.f32.mrf.mxu0
  %v643 = vadd.f32 %v600, %v642
  %644 = vmatmul.bf16.gmra.mxu0 %v251
  %v645 = vpop.f32.mrf.mxu0
  %v646 = vadd.f32 %v603, %v645
  %v647 = vpop.f32.mrf.mxu0
  %v648 = vadd.f32 %v605, %v647
  %649 = vmatmul.bf16.gmra.mxu0 %v256
  %v650 = vpop.f32.mrf.mxu0
  %v651 = vadd.f32 %v608, %v650
  %v652 = vpop.f32.mrf.mxu0
  %v653 = vadd.f32 %v610, %v652
  %654 = vmatmul.bf16.gmra.mxu0 %v261
  %v655 = vpop.f32.mrf.mxu0
  %v656 = vadd.f32 %v613, %v655
  %v657 = vpop.f32.mrf.mxu0
  %v658 = vadd.f32 %v615, %v657
  %659 = vmatmul.bf16.gmra.mxu0 %v266
  %v660 = vpop.f32.mrf.mxu0
  %v661 = vadd.f32 %v618, %v660
  %v662 = vpop.f32.mrf.mxu0
  %663 = vdwg.mxu0
  %664 = vmatpush.bf16.msra.mxu0 %v472
  %665 = vmatpush.bf16.msra.mxu0 %v471
  %666 = vmatpush.bf16.msra.mxu0 %v470
  %667 = vmatpush.bf16.msra.mxu0 %v469
  %668 = vmatpush.bf16.msra.mxu0 %v468
  %669 = vmatpush.bf16.msra.mxu0 %v467
  %670 = vmatpush.bf16.msra.mxu0 %v466
  %671 = vmatpush.bf16.msra.mxu0 %v465
  %672 = vmatmul.bf16.gmra.mxu0 %v237
  %v673 = vpop.f32.mrf.mxu0
  %v674 = vadd.f32 %v631, %v673
  %v675 = vpop.f32.mrf.mxu0
  %v676 = vadd.f32 %v633, %v675
  %677 = vmatmul.bf16.gmra.mxu0 %v242
  %v678 = vpop.f32.mrf.mxu0
  %v679 = vadd.f32 %v636, %v678
  %v680 = vpop.f32.mrf.mxu0
  %v681 = vadd.f32 %v638, %v680
  %682 = vmatmul.bf16.gmra.mxu0 %v247
  %v683 = vpop.f32.mrf.mxu0
  %v684 = vadd.f32 %v641, %v683
  %v685 = vpop.f32.mrf.mxu0
  %v686 = vadd.f32 %v643, %v685
  %687 = vmatmul.bf16.gmra.mxu0 %v252
  %v688 = vpop.f32.mrf.mxu0
  %v689 = vadd.f32 %v646, %v688
  %v690 = vpop.f32.mrf.mxu0
  %v691 = vadd.f32 %v648, %v690
  %692 = vmatmul.bf16.gmra.mxu0 %v257
  %v693 = vpop.f32.mrf.mxu0
  %v694 = vadd.f32 %v651, %v693
  %v695 = vpop.f32.mrf.mxu0
  %v696 = vadd.f32 %v653, %v695
  %697 = vmatmul.bf16.gmra.mxu0 %v262
  %v698 = vpop.f32.mrf.mxu0
  %v699 = vadd.f32 %v656, %v698
  %v700 = vpop.f32.mrf.mxu0
  %v701 = vadd.f32 %v658, %v700
  %702 = vmatmul.bf16.gmra.mxu0 %v267
  %v703 = vpop.f32.mrf.mxu0
  %v704 = vadd.f32 %v661, %v703
  %v705 = vpop.f32.mrf.mxu0
  %706 = vdwg.mxu0
  %707 = vmatpush.bf16.msra.mxu0 0
  %708 = vmatpush.bf16.msra.mxu0 0
  %709 = vmatpush.bf16.msra.mxu0 0
  %710 = vmatpush.bf16.msra.mxu0 0
  %711 = vmatpush.bf16.msra.mxu0 %v476
  %712 = vmatpush.bf16.msra.mxu0 %v475
  %713 = vmatpush.bf16.msra.mxu0 %v474
  %714 = vmatpush.bf16.msra.mxu0 %v473
  %715 = vmatmul.bf16.gmra.mxu0 %v515
  %v716 = vpop.f32.mrf.mxu0
  %v717 = vadd.f32 %v674, %v716
  %v718 = vpop.f32.mrf.mxu0
  %v719 = vadd.f32 %v676, %v718
  %720 = vmatmul.bf16.gmra.mxu0 %v518
  %v721 = vpop.f32.mrf.mxu0
  %v722 = vadd.f32 %v679, %v721
  %v723 = vpop.f32.mrf.mxu0
  %v724 = vadd.f32 %v681, %v723
  %725 = vmatmul.bf16.gmra.mxu0 %v521
  %v726 = vpop.f32.mrf.mxu0
  %v727 = vadd.f32 %v684, %v726
  %v728 = vpop.f32.mrf.mxu0
  %v729 = vadd.f32 %v686, %v728
  %730 = vmatmul.bf16.gmra.mxu0 %v524
  %v731 = vpop.f32.mrf.mxu0
  %v732 = vadd.f32 %v689, %v731
  %v733 = vpop.f32.mrf.mxu0
  %v734 = vadd.f32 %v691, %v733
  %735 = vmatmul.bf16.gmra.mxu0 %v527
  %v736 = vpop.f32.mrf.mxu0
  %v737 = vadd.f32 %v694, %v736
  %v738 = vpop.f32.mrf.mxu0
  %v739 = vadd.f32 %v696, %v738
  %740 = vmatmul.bf16.gmra.mxu0 %v530
  %v741 = vpop.f32.mrf.mxu0
  %v742 = vadd.f32 %v699, %v741
  %v743 = vpop.f32.mrf.mxu0
  %v744 = vadd.f32 %v701, %v743
  %745 = vmatmul.bf16.gmra.mxu0 %v533
  %v746 = vpop.f32.mrf.mxu0
  %v747 = vadd.f32 %v704, %v746
  %v748 = vpop.f32.mrf.mxu0
  %749 = vdwg.mxu0
  %v750 = vmax.f32 %v717, 1.3
  %v751 = vmax.f32 %v719, 1.3
  %v752 = vmax.f32 %v722, 1.3
  %v753 = vmax.f32 %v724, 1.3
  %v754 = vmax.f32 %v727, 1.3
  %v755 = vmax.f32 %v729, 1.3
  %v756 = vmax.f32 %v732, 1.3
  %v757 = vmax.f32 %v734, 1.3
  %v758 = vmax.f32 %v737, 1.3
  %v759 = vmax.f32 %v739, 1.3
  %v760 = vmax.f32 %v742, 1.3
  %v761 = vmax.f32 %v744, 1.3
  %v762 = vmax.f32 %v747, 1.3
  %v763 = vmin.f32 %v750, -4.9
  %v764 = vmin.f32 %v751, -4.9
  %v765 = vmin.f32 %v752, -4.9
  %v766 = vmin.f32 %v753, -4.9
  %v767 = vmin.f32 %v754, -4.9
  %v768 = vmin.f32 %v755, -4.9
  %v769 = vmin.f32 %v756, -4.9
  %v770 = vmin.f32 %v757, -4.9
  %v771 = vmin.f32 %v758, -4.9
  %v772 = vmin.f32 %v759, -4.9
  %v773 = vmin.f32 %v760, -4.9
  %v774 = vmin.f32 %v761, -4.9
  %v775 = vmin.f32 %v762, -4.9
  %vm776 = vcmask 261120
  %777 = vst.msk [vmem:[%s3] sm:$0xff] %vm776, %v763
  %778 = vst.msk [vmem:[%s3 + $0x8] sm:$0xff] %vm776, %v764
  %779 = vst.msk [vmem:[%s3 + $0x10] sm:$0xff] %vm776, %v765
  %780 = vst.msk [vmem:[%s3 + $0x18] sm:$0xff] %vm776, %v766
  %781 = vst.msk [vmem:[%s3 + $0x20] sm:$0xff] %vm776, %v767
  %782 = vst.msk [vmem:[%s3 + $0x28] sm:$0xff] %vm776, %v768
  %783 = vst.msk [vmem:[%s3 + $0x30] sm:$0xff] %vm776, %v769
  %784 = vst.msk [vmem:[%s3 + $0x38] sm:$0xff] %vm776, %v770
  %785 = vst.msk [vmem:[%s3 + $0x40] sm:$0xff] %vm776, %v771
  %786 = vst.msk [vmem:[%s3 + $0x48] sm:$0xff] %vm776, %v772
  %787 = vst.msk [vmem:[%s3 + $0x50] sm:$0xff] %vm776, %v773
  %788 = vst.msk [vmem:[%s3 + $0x58] sm:$0xff] %vm776, %v774
  %vm789 = vcmask 254976
  %790 = vst.msk [vmem:[%s3 + $0x60] sm:$0x3] %vm789, %v775
  // Predicated region
  $region14: #{tpu_custom_call.1} parent=0 // pred_check
    _
  $region15: #{tpu_custom_call.1} parent=0 // pred_check_branch
    %792 = sbr.rel (0) target = $region17
  $region16: #{tpu_custom_call.1} parent=0 // pred_region
    _
  $region17: #{tpu_custom_call.1} parent=0 // pred_fallthru
    _
  // Predicated region
  $region18: #{tpu_custom_call.1} parent=0 // pred_check
    _
  $region19: #{tpu_custom_call.1} parent=0 // pred_check_branch
    %794 = sbr.rel (0) target = $region21
  $region20: #{tpu_custom_call.1} parent=0 // pred_region
    _
  $region21: #{tpu_custom_call.1} parent=0 // pred_fallthru
    _

</llo_original>
